<compile_context>
chip_gen: v7x
topology: tpu7x:2x2x1
jax: 0.10.0
libtpu: 0.0.40
codegen_flags: <defaults>
</compile_context>

<pallas_src>
import functools

import jax
import jax.numpy as jnp
from jax import lax
from jax.experimental import pallas as pl
from jax.experimental.pallas import tpu as pltpu

_LANES = 128
_SUBLANES = 8


def _custom_loss_kernel(pred_ref, lab_ref, sum_ref, neg_ref,
                        *, n, tile_r, tiles_per_chunk):
    c = pl.program_id(0)          # chunk axis ("parallel", dual-TC on v7x)
    i = pl.program_id(1)          # streaming/reduction axis ("arbitrary")

    @pl.when(i == 0)
    def _():
        sum_ref[...] = jnp.zeros_like(sum_ref)
        neg_ref[...] = jnp.zeros_like(neg_ref)

    p = pred_ref[...].astype(jnp.float32)     # (tile_r, 128)
    y = lab_ref[...].astype(jnp.float32)      # (tile_r, 128)

    # Mask for the padded tail: padding must not contribute to the loss sum
    # nor be counted as a negative example.
    row0 = (c * tiles_per_chunk + i) * tile_r
    rid = lax.broadcasted_iota(jnp.int32, (tile_r, _LANES), 0) + row0
    lid = lax.broadcasted_iota(jnp.int32, (tile_r, _LANES), 1)
    valid = (rid * _LANES + lid) < n

    # Numerically stable BCE-with-logits:
    #   y*log(sigmoid(p)) + (1-y)*log(1-sigmoid(p))
    #     = y*p - max(p, 0) - log1p(exp(-|p|))
    term = y * p - jnp.maximum(p, 0.0) - jnp.log1p(jnp.exp(-jnp.abs(p)))
    term = jnp.where(valid, term, 0.0)
    is_neg = jnp.where(jnp.logical_and(valid, y == 0.0), 1.0, 0.0)

    # Per-(sublane, lane) partial sums: pure VPU (vreg-wise) adds in the hot
    # loop; the expensive cross-lane reduce happens once, outside the kernel.
    sum_ref[...] += term.reshape(tile_r // _SUBLANES, _SUBLANES, _LANES).sum(axis=0)[None]
    neg_ref[...] += is_neg.reshape(tile_r // _SUBLANES, _SUBLANES, _LANES).sum(axis=0)[None]


def custom_loss(predicted_values, labels, *, max_tile_rows=512, num_chunks=2):
    """predicted_values: (N,) float, labels: (N,) (0/1). Returns shape (1,) f32.

    NOTE: like the PyTorch module, pos == 0 (no nonzero labels) yields inf/nan.
    """
    n = predicted_values.shape[0]

    rows = max(1, -(-n // _LANES))                                 # ceil(N/128)
    tile_r = min(max_tile_rows, ((rows + _SUBLANES - 1) // _SUBLANES) * _SUBLANES)
    tiles_per_chunk = max(1, -(-rows // (num_chunks * tile_r)))
    rows_padded = num_chunks * tiles_per_chunk * tile_r
    total = rows_padded * _LANES

    p_pad = jnp.pad(predicted_values, (0, total - n)).reshape(rows_padded, _LANES)
    y_pad = jnp.pad(labels, (0, total - n)).reshape(rows_padded, _LANES)

    kernel = functools.partial(
        _custom_loss_kernel, n=n, tile_r=tile_r, tiles_per_chunk=tiles_per_chunk)

    part_sum, part_neg = pl.pallas_call(
        kernel,
        out_shape=(
            jax.ShapeDtypeStruct((num_chunks, _SUBLANES, _LANES), jnp.float32),
            jax.ShapeDtypeStruct((num_chunks, _SUBLANES, _LANES), jnp.float32),
        ),
        grid_spec=pltpu.PrefetchScalarGridSpec(
            num_scalar_prefetch=0,
            grid=(num_chunks, tiles_per_chunk),
            in_specs=[
                pl.BlockSpec((tile_r, _LANES),
                             lambda c, i: (c * tiles_per_chunk + i, 0)),
                pl.BlockSpec((tile_r, _LANES),
                             lambda c, i: (c * tiles_per_chunk + i, 0)),
            ],
            out_specs=(
                pl.BlockSpec((1, _SUBLANES, _LANES), lambda c, i: (c, 0, 0)),
                pl.BlockSpec((1, _SUBLANES, _LANES), lambda c, i: (c, 0, 0)),
            ),
        ),
        compiler_params=pltpu.CompilerParams(
            dimension_semantics=("parallel", "arbitrary"),
            vmem_limit_bytes=32 * 1024 * 1024,   # tiles are ~256 KiB; safe on v5e/v6e/v7x
        ),
    )(p_pad, y_pad)

    # Trivial scalar epilogue (endorsed: tiny cross-lane reduce + scale in JAX).
    loss_sum = jnp.sum(part_sum)
    neg = jnp.sum(part_neg)
    pos = jnp.asarray(n, jnp.float32) - neg
    out = (-1.0 / ((1.0 + neg) * pos)) * loss_sum
    return out.reshape(1)


def _reference(predicted_values, labels):
    p = predicted_values.astype(jnp.float32)
    y = labels.astype(jnp.float32)
    sig = jax.nn.sigmoid(p)
    loss_sum = jnp.sum(y * jnp.log(sig) + (1.0 - y) * jnp.log(1.0 - sig))
    neg = jnp.sum(y == 0.0).astype(jnp.float32)
    pos = jnp.sum(y != 0.0).astype(jnp.float32)
    return (-1.0 / ((1.0 + neg) * pos) * loss_sum).reshape(1)


if __name__ == "__main__":
    key = jax.random.PRNGKey(0)
    k_pred, k_lab = jax.random.split(key)

    # Case 1: matches the module's tiny shape (seq = 8 examples).
    N = 8
    predicted_values = jax.random.normal(k_pred, (N,), dtype=jnp.float32)
    labels = (jax.random.uniform(k_lab, (N,)) > 0.5).astype(jnp.float32)
    labels = labels.at[0].set(1.0)   # guarantee at least one positive example

    out = jax.block_until_ready(custom_loss(predicted_values, labels))
    ref = _reference(predicted_values, labels)
    assert out.shape == (1,)
    assert jnp.allclose(out, ref, rtol=1e-5, atol=1e-6), (out, ref)

    # Case 2: non-multiple-of-128 length to exercise tiling + tail masking.
    k_pred2, k_lab2 = jax.random.split(jax.random.PRNGKey(1))
    N2 = 777
    pred2 = jax.random.normal(k_pred2, (N2,), dtype=jnp.float32)
    lab2 = (jax.random.uniform(k_lab2, (N2,)) > 0.5).astype(jnp.float32)
    lab2 = lab2.at[0].set(1.0)

    out2 = jax.block_until_ready(custom_loss(pred2, lab2))
    ref2 = _reference(pred2, lab2)
    assert out2.shape == (1,)
    assert jnp.allclose(out2, ref2, rtol=1e-5, atol=1e-6), (out2, ref2)

    print("KERNEL_OK")
</pallas_src>

<mosaic_0001>
module attributes {stable_mosaic.version = 11 : i64} {
  func.func @_custom_loss_kernel(%arg0: i32, %arg1: i32, %arg2: memref<8x128xf32, #tpu.memory_space<vmem>>, %arg3: memref<8x128xf32, #tpu.memory_space<vmem>>, %arg4: memref<1x8x128xf32, #tpu.memory_space<vmem>>, %arg5: memref<1x8x128xf32, #tpu.memory_space<vmem>>) attributes {dimension_semantics = [#tpu.dimension_semantics<parallel>, #tpu.dimension_semantics<arbitrary>], iteration_bounds = array<i64: 2, 1>, scalar_prefetch = 0 : i64, scratch_operands = 0 : i64, tpu.core_type = #tpu.core_type<tc>, window_params = [{transform_indices = @transform_0, window_bounds = array<i64: 8, 128>}, {transform_indices = @transform_1, window_bounds = array<i64: 8, 128>}, {transform_indices = @transform_2, window_bounds = array<i64: 1, 8, 128>}, {transform_indices = @transform_3, window_bounds = array<i64: 1, 8, 128>}]} {
    %c0_i32 = arith.constant 0 : i32
    %0 = arith.cmpi eq, %arg1, %c0_i32 : i32
    %1 = arith.extui %0 : i1 to i32
    %c0_i32_0 = arith.constant 0 : i32
    %2 = arith.cmpi ne, %1, %c0_i32_0 : i32
    scf.if %2 {
      %cst_24 = arith.constant 0.000000e+00 : f32
      %47 = vector.broadcast %cst_24 : f32 to vector<1x8x128xf32>
      %c0_25 = arith.constant 0 : index
      %c0_26 = arith.constant 0 : index
      %c0_27 = arith.constant 0 : index
      %48 = vector.load %arg4[%c0_25, %c0_26, %c0_27] : memref<1x8x128xf32, #tpu.memory_space<vmem>>, vector<1x8x128xf32>
      tpu.vector_store %arg4[%c0_25, %c0_26, %c0_27], %47 {strides = array<i32>} : memref<1x8x128xf32, #tpu.memory_space<vmem>>, vector<1x8x128xf32>,
      %cst_28 = arith.constant 0.000000e+00 : f32
      %49 = vector.broadcast %cst_28 : f32 to vector<1x8x128xf32>
      %c0_29 = arith.constant 0 : index
      %c0_30 = arith.constant 0 : index
      %c0_31 = arith.constant 0 : index
      %50 = vector.load %arg5[%c0_29, %c0_30, %c0_31] : memref<1x8x128xf32, #tpu.memory_space<vmem>>, vector<1x8x128xf32>
      tpu.vector_store %arg5[%c0_29, %c0_30, %c0_31], %49 {strides = array<i32>} : memref<1x8x128xf32, #tpu.memory_space<vmem>>, vector<1x8x128xf32>,
    } else {
    }
    %c0 = arith.constant 0 : index
    %c0_1 = arith.constant 0 : index
    %3 = vector.load %arg2[%c0, %c0_1] : memref<8x128xf32, #tpu.memory_space<vmem>>, vector<8x128xf32>
    %c0_2 = arith.constant 0 : index
    %c0_3 = arith.constant 0 : index
    %4 = vector.load %arg3[%c0_2, %c0_3] : memref<8x128xf32, #tpu.memory_space<vmem>>, vector<8x128xf32>
    %c1_i32 = arith.constant 1 : i32
    %5 = arith.muli %arg0, %c1_i32 : i32
    %6 = arith.addi %5, %arg1 : i32
    %c8_i32 = arith.constant 8 : i32
    %7 = arith.muli %6, %c8_i32 : i32
    %8 = tpu.iota {dimensions = array<i32: 0>} : vector<8x128xi32>
    %9 = vector.broadcast %7 : i32 to vector<8x128xi32>
    %10 = arith.addi %8, %9 : vector<8x128xi32>
    %11 = tpu.iota {dimensions = array<i32: 1>} : vector<8x128xi32>
    %c128_i32 = arith.constant 128 : i32
    %12 = vector.broadcast %c128_i32 : i32 to vector<8x128xi32>
    %13 = arith.muli %10, %12 : vector<8x128xi32>
    %14 = arith.addi %13, %11 : vector<8x128xi32>
    %c8_i32_4 = arith.constant 8 : i32
    %15 = vector.broadcast %c8_i32_4 : i32 to vector<8x128xi32>
    %16 = arith.cmpi slt, %14, %15 : vector<8x128xi32>
    %17 = arith.mulf %4, %3 : vector<8x128xf32>
    %cst = arith.constant 0.000000e+00 : f32
    %18 = vector.broadcast %cst : f32 to vector<8x128xf32>
    %19 = arith.maximumf %3, %18 : vector<8x128xf32>
    %20 = arith.subf %17, %19 : vector<8x128xf32>
    %21 = math.absf %3 : vector<8x128xf32>
    %cst_5 = arith.constant 0.000000e+00 : f32
    %22 = vector.broadcast %cst_5 : f32 to vector<8x128xf32>
    %23 = arith.subf %22, %21 : vector<8x128xf32>
    %24 = math.exp %23 : vector<8x128xf32>
    %25 = math.log1p %24 : vector<8x128xf32>
    %26 = arith.subf %20, %25 : vector<8x128xf32>
    %cst_6 = arith.constant 0.000000e+00 : f32
    %27 = vector.broadcast %cst_6 : f32 to vector<8x128xf32>
    %28 = arith.select %16, %26, %27 : vector<8x128xi1>, vector<8x128xf32>
    %cst_7 = arith.constant 0.000000e+00 : f32
    %29 = vector.broadcast %cst_7 : f32 to vector<8x128xf32>
    %30 = arith.cmpf oeq, %4, %29 : vector<8x128xf32>
    %31 = arith.andi %16, %30 : vector<8x128xi1>
    %cst_8 = arith.constant 1.000000e+00 : f32
    %cst_9 = arith.constant 0.000000e+00 : f32
    %32 = vector.broadcast %cst_8 : f32 to vector<8x128xf32>
    %33 = vector.broadcast %cst_9 : f32 to vector<8x128xf32>
    %34 = arith.select %31, %32, %33 : vector<8x128xi1>, vector<8x128xf32>
    %c0_10 = arith.constant 0 : index
    %c0_11 = arith.constant 0 : index
    %c0_12 = arith.constant 0 : index
    %35 = vector.load %arg4[%c0_10, %c0_11, %c0_12] : memref<1x8x128xf32, #tpu.memory_space<vmem>>, vector<1x8x128xf32>
    %36 = vector.shape_cast %28 : vector<8x128xf32> to vector<1x8x128xf32>
    %cst_13 = arith.constant dense<0.000000e+00> : vector<8x128xf32>
    %37 = vector.multi_reduction <add>, %36, %cst_13 [0] : vector<1x8x128xf32> to vector<8x128xf32>
    %38 = vector.shape_cast %37 : vector<8x128xf32> to vector<1x8x128xf32>
    %39 = arith.addf %35, %38 : vector<1x8x128xf32>
    %c0_14 = arith.constant 0 : index
    %c0_15 = arith.constant 0 : index
    %c0_16 = arith.constant 0 : index
    %40 = vector.load %arg4[%c0_14, %c0_15, %c0_16] : memref<1x8x128xf32, #tpu.memory_space<vmem>>, vector<1x8x128xf32>
    tpu.vector_store %arg4[%c0_14, %c0_15, %c0_16], %39 {strides = array<i32>} : memref<1x8x128xf32, #tpu.memory_space<vmem>>, vector<1x8x128xf32>,
    %c0_17 = arith.constant 0 : index
    %c0_18 = arith.constant 0 : index
    %c0_19 = arith.constant 0 : index
    %41 = vector.load %arg5[%c0_17, %c0_18, %c0_19] : memref<1x8x128xf32, #tpu.memory_space<vmem>>, vector<1x8x128xf32>
    %42 = vector.shape_cast %34 : vector<8x128xf32> to vector<1x8x128xf32>
    %cst_20 = arith.constant dense<0.000000e+00> : vector<8x128xf32>
    %43 = vector.multi_reduction <add>, %42, %cst_20 [0] : vector<1x8x128xf32> to vector<8x128xf32>
    %44 = vector.shape_cast %43 : vector<8x128xf32> to vector<1x8x128xf32>
    %45 = arith.addf %41, %44 : vector<1x8x128xf32>
    %c0_21 = arith.constant 0 : index
    %c0_22 = arith.constant 0 : index
    %c0_23 = arith.constant 0 : index
    %46 = vector.load %arg5[%c0_21, %c0_22, %c0_23] : memref<1x8x128xf32, #tpu.memory_space<vmem>>, vector<1x8x128xf32>
    tpu.vector_store %arg5[%c0_21, %c0_22, %c0_23], %45 {strides = array<i32>} : memref<1x8x128xf32, #tpu.memory_space<vmem>>, vector<1x8x128xf32>,
    return
  }
  func.func @transform_0(%arg0: i32, %arg1: i32) -> (i32, i32) {
    %c1_i32 = arith.constant 1 : i32
    %0 = arith.muli %arg0, %c1_i32 : i32
    %1 = arith.addi %0, %arg1 : i32
    %c0_i32 = arith.constant 0 : i32
    %c0_i32_0 = arith.constant 0 : i32
    return %1, %c0_i32 : i32, i32
  }
  func.func @transform_1(%arg0: i32, %arg1: i32) -> (i32, i32) {
    %c1_i32 = arith.constant 1 : i32
    %0 = arith.muli %arg0, %c1_i32 : i32
    %1 = arith.addi %0, %arg1 : i32
    %c0_i32 = arith.constant 0 : i32
    %c0_i32_0 = arith.constant 0 : i32
    return %1, %c0_i32 : i32, i32
  }
  func.func @transform_2(%arg0: i32, %arg1: i32) -> (i32, i32, i32) {
    %c0_i32 = arith.constant 0 : i32
    %c0_i32_0 = arith.constant 0 : i32
    %c0_i32_1 = arith.constant 0 : i32
    return %arg0, %c0_i32, %c0_i32_0 : i32, i32, i32
  }
  func.func @transform_3(%arg0: i32, %arg1: i32) -> (i32, i32, i32) {
    %c0_i32 = arith.constant 0 : i32
    %c0_i32_0 = arith.constant 0 : i32
    %c0_i32_1 = arith.constant 0 : i32
    return %arg0, %c0_i32, %c0_i32_0 : i32, i32, i32
  }
}

</mosaic_0001>

<llo_original>
// kernel: tpu_custom_call.1
$region0: #{tpu_custom_call.1}
  #allocation0 [shape = 'u32[]', space=smem, size = 0x4, offset = 0x4, fixed_abs, tag = 'smem constant byte address 0x4 - core index']
  #allocation1 [shape = 'u32[144,128]{1,0:T(1,128)}', space=vmem, size = 0x12000, scoped, tag = 'internal scratch']
  %s0 = inlined_call_operand.hbm [shape: f32[16,128], index: 0, kind: input, shape index: {}]
  %s1 = inlined_call_operand.hbm [shape: f32[16,128], index: 1, kind: input, shape index: {}]
  %s2 = inlined_call_operand.hbm [shape: f32[2,8,128], index: 2, kind: output, shape index: {0}]
  %s3 = inlined_call_operand.hbm [shape: f32[2,8,128], index: 3, kind: output, shape index: {1}]
  %4 = xla_tuple %s2, %s3
  %s5 = sld [smem:[#allocation0]]
  $region61: #{tpu_custom_call.1} parent=0
    _
  %s7 = ssub.s32 1, %s5
  %s8 = scalar_select 0, %s7, %s5
  $region1: #{tpu_custom_call.1} parent=0
    #allocation2 [shape = 'u8[8192]{0}', space=vmem, size = 0x2000, scoped, tag = 'input window, operand 0']
    #allocation3 [shape = 's32[2]{0}', space=sflag, size = 0x8, scoped, tag = 'scoped memory for tpu_custom_call.1']
    #allocation4 [shape = 's32[2]{0}', space=sflag, size = 0x8, scoped, tag = 'scoped memory for tpu_custom_call.1']
    #allocation5 [shape = 'u8[8192]{0}', space=vmem, size = 0x2000, scoped, tag = 'input window, operand 1']
    #allocation6 [shape = 's32[2]{0}', space=sflag, size = 0x8, scoped, tag = 'scoped memory for tpu_custom_call.1']
    #allocation7 [shape = 'u8[8192]{0}', space=vmem, size = 0x2000, scoped, tag = 'output window, operand 0']
    #allocation8 [shape = 'u8[8192]{0}', space=vmem, size = 0x2000, scoped, tag = 'output window, operand 1']
    #allocation9 [shape = 's32[2]{0}', space=sflag, size = 0x8, scoped, tag = 'scoped memory for tpu_custom_call.1']
    %9 = vsyncpa [#allocation3], 0
    %s10 = scalar_lea.sflag [#allocation3], 1
    %11 = vsyncpa %s10, 0
    %12 = vsyncpa [#allocation6], 0
    %s13 = scalar_lea.sflag [#allocation6], 1
    %14 = vsyncpa %s13, 0
    %15 = vsyncpa [#allocation4], 0
    %s16 = scalar_lea.sflag [#allocation4], 1
    %17 = vsyncpa %s16, 0
    %18 = vsyncpa [#allocation9], 0
    %s19 = scalar_lea.sflag [#allocation9], 1
    %20 = vsyncpa %s19, 0
    loop: start=0, step=1, limit=4
    $region2: #{tpu_custom_call.1} parent=1 // loop_pre_header
      _
    $region3: #{tpu_custom_call.1} parent=1 // loop_header
      %s22 = sphi 0, %s26
      %p23 = scmp.ge.s32.totalorder %s22, 4
      %s29 = sphi 0, %s41
      %s30 = sphi 0, %s37
      %s31 = sphi 0, %s29
      %s32 = sphi 0, %s30
      %s33 = sphi 0, %s31
      %s34 = sphi 0, %s32
      %s46 = sphi 0, %s48
      %s49 = sphi 0, %s46
      %s50 = sphi 0, %s49
      %s66 = sphi 0, %s50
      %s74 = sphi 0, %s76
      %s77 = sphi 0, %s74
      %s78 = sphi 0, %s77
      %s94 = sphi 0, %s78
      %s100 = sphi 0, %s102
      %s103 = sphi 0, %s100
      %s104 = sphi 0, %s103
      %s120 = sphi 0, %s104
      %s126 = sphi 0, %s128
      %s129 = sphi 0, %s126
      %s130 = sphi 0, %s129
      %s146 = sphi 0, %s130
    $region4: #{tpu_custom_call.1} parent=1 // loop_header_branch
      %25 = sbr.rel (%p23) target = $region8
    $region5: #{tpu_custom_call.1} parent=1 // loop_body
      %s27 = ssub.s32 %s22, 1
      %s28 = ssub.s32 %s22, 2
      %s35 = sadd.s32 1, %s30
      %p36 = scmp.ge.s32.totalorder %s35, 1
      %s37 = scalar_select %p36, 0, %s35
      %s38 = sadd.s32 1, %s29
      %s39 = scalar_select %p36, %s38, %s29
      %p40 = scmp.ge.s32.totalorder %s39, 2
      %s41 = scalar_select %p40, 0, %s39
      %s42 = sadd.s32 %s29, %s30
      %s43 = sadd.s32 %s41, %s37
      %s44 = ssub.s32 %s42, %s43
      %p45 = scmp.eq.s32.totalorder %s44, 0
      %s47 = sadd.s32 %s46, 1
      %s48 = scalar_select %p45, %s46, %s47
      %p51 = pneg %p45
      %p52 = scmp.eq.s32.totalorder %s22, 1
      %p53 = por %p51, %p52
      %p54 = scmp.ne.s32.totalorder %s46, %s49
      %p55 = scmp.eq.s32.totalorder %s22, 0
      %p56 = por %p54, %p55
      %p57 = scmp.ne.s32.totalorder %s46, %s49
      %p58 = scmp.eq.s32.totalorder %s27, 1
      %p59 = por %p57, %p58
      %p60 = scmp.ne.s32.totalorder %s49, %s50
      %p61 = scmp.eq.s32.totalorder %s27, 0
      %p62 = por %p60, %p61
      %p63 = scmp.ne.s32.totalorder %s49, %s50
      %p64 = scmp.eq.s32.totalorder %s28, 1
      %p65 = por %p63, %p64
      %p67 = scmp.ne.s32.totalorder %s50, %s66
      %p68 = scmp.eq.s32.totalorder %s28, 0
      %p69 = por %p67, %p68
      %s70 = sadd.s32 %s29, %s30
      %s71 = sadd.s32 %s41, %s37
      %s72 = ssub.s32 %s70, %s71
      %p73 = scmp.eq.s32.totalorder %s72, 0
      %s75 = sadd.s32 %s74, 1
      %s76 = scalar_select %p73, %s74, %s75
      %p79 = pneg %p73
      %p80 = scmp.eq.s32.totalorder %s22, 1
      %p81 = por %p79, %p80
      %p82 = scmp.ne.s32.totalorder %s74, %s77
      %p83 = scmp.eq.s32.totalorder %s22, 0
      %p84 = por %p82, %p83
      %p85 = scmp.ne.s32.totalorder %s74, %s77
      %p86 = scmp.eq.s32.totalorder %s27, 1
      %p87 = por %p85, %p86
      %p88 = scmp.ne.s32.totalorder %s77, %s78
      %p89 = scmp.eq.s32.totalorder %s27, 0
      %p90 = por %p88, %p89
      %p91 = scmp.ne.s32.totalorder %s77, %s78
      %p92 = scmp.eq.s32.totalorder %s28, 1
      %p93 = por %p91, %p92
      %p95 = scmp.ne.s32.totalorder %s78, %s94
      %p96 = scmp.eq.s32.totalorder %s28, 0
      %p97 = por %p95, %p96
      %s98 = ssub.s32 %s29, %s41
      %p99 = scmp.eq.s32.totalorder %s98, 0
      %s101 = sadd.s32 %s100, 1
      %s102 = scalar_select %p99, %s100, %s101
      %p105 = pneg %p99
      %p106 = scmp.eq.s32.totalorder %s22, 1
      %p107 = por %p105, %p106
      %p108 = scmp.ne.s32.totalorder %s100, %s103
      %p109 = scmp.eq.s32.totalorder %s22, 0
      %p110 = por %p108, %p109
      %p111 = scmp.ne.s32.totalorder %s100, %s103
      %p112 = scmp.eq.s32.totalorder %s27, 1
      %p113 = por %p111, %p112
      %p114 = scmp.ne.s32.totalorder %s103, %s104
      %p115 = scmp.eq.s32.totalorder %s27, 0
      %p116 = por %p114, %p115
      %p117 = scmp.ne.s32.totalorder %s103, %s104
      %p118 = scmp.eq.s32.totalorder %s28, 1
      %p119 = por %p117, %p118
      %p121 = scmp.ne.s32.totalorder %s104, %s120
      %p122 = scmp.eq.s32.totalorder %s28, 0
      %p123 = por %p121, %p122
      %s124 = ssub.s32 %s29, %s41
      %p125 = scmp.eq.s32.totalorder %s124, 0
      %s127 = sadd.s32 %s126, 1
      %s128 = scalar_select %p125, %s126, %s127
      %p131 = pneg %p125
      %p132 = scmp.eq.s32.totalorder %s22, 1
      %p133 = por %p131, %p132
      %p134 = scmp.ne.s32.totalorder %s126, %s129
      %p135 = scmp.eq.s32.totalorder %s22, 0
      %p136 = por %p134, %p135
      %p137 = scmp.ne.s32.totalorder %s126, %s129
      %p138 = scmp.eq.s32.totalorder %s27, 1
      %p139 = por %p137, %p138
      %p140 = scmp.ne.s32.totalorder %s129, %s130
      %p141 = scmp.eq.s32.totalorder %s27, 0
      %p142 = por %p140, %p141
      %p143 = scmp.ne.s32.totalorder %s129, %s130
      %p144 = scmp.eq.s32.totalorder %s28, 1
      %p145 = por %p143, %p144
      %p147 = scmp.ne.s32.totalorder %s130, %s146
      %p148 = scmp.eq.s32.totalorder %s28, 0
      %p149 = por %p147, %p148
      %p150 = scmp.le.s32.totalorder 1, %s22
      %p151 = scmp.lt.s32.totalorder %s22, 3
      %p152 = pnand %p150, %p151
      %p153 = pneg %p152
      // Predicated region
      $region9: #{tpu_custom_call.1} parent=5 // pred_check
        _
      $region10: #{tpu_custom_call.1} parent=5 // pred_check_branch
        %155 = sbr.rel (%p152) target = $region12
      $region11: #{tpu_custom_call.1} parent=5 // pred_region
        %s156 = ssub.s32 %s22, 1
      $region12: #{tpu_custom_call.1} parent=5 // pred_fallthru
        _
      %p157 = scmp.lt.s32.totalorder %s22, 2
      // Predicated region
      $region13: #{tpu_custom_call.1} parent=5 // pred_check
        %p158 = pneg %p157
      $region14: #{tpu_custom_call.1} parent=5 // pred_check_branch
        %160 = sbr.rel (%p158) target = $region16
      $region15: #{tpu_custom_call.1} parent=5 // pred_region
        // Predicated region
        $region17: #{tpu_custom_call.1} parent=15 // pred_check
          %p161 = pneg %p56
        $region18: #{tpu_custom_call.1} parent=15 // pred_check_branch
          %163 = sbr.rel (%p161) target = $region20
        $region19: #{tpu_custom_call.1} parent=15 // pred_region
          %s164 = sand.u32 %s46, 1
          %s165 = scalar_lea.sflag [#allocation3], %s164
          %s166 = sand.u32 %s46, 1
          %s167 = smul.addr %s166, 8
          %s168 = scalar_lea.vmem [#allocation2], %s167
          %s169 = sadd.s32 %s29, %s30
          %s171 = ssub.s32 128, 128
          %172 = vsyncadd %s165, %s171
          %s173 = smul.addr %s169, 128
          %s174 = scalar_lea.hbm %s0, %s173
          %s176 = sshll.u32 %s168, 4
          %s177 = int_to_ptr.vmem [resolvable:$true] %s176
          %179 = dma.hbm_to_vmem [thread:$0]  %s174, 128, %s177, %s165
        $region20: #{tpu_custom_call.1} parent=15 // pred_fallthru
          _
        // Predicated region
        $region21: #{tpu_custom_call.1} parent=15 // pred_check
          %p180 = pneg %p84
        $region22: #{tpu_custom_call.1} parent=15 // pred_check_branch
          %182 = sbr.rel (%p180) target = $region24
        $region23: #{tpu_custom_call.1} parent=15 // pred_region
          %s183 = sand.u32 %s74, 1
          %s184 = scalar_lea.sflag [#allocation6], %s183
          %s185 = sand.u32 %s74, 1
          %s186 = smul.addr %s185, 8
          %s187 = scalar_lea.vmem [#allocation5], %s186
          %s188 = sadd.s32 %s29, %s30
          %s190 = ssub.s32 128, 128
          %191 = vsyncadd %s184, %s190
          %s192 = smul.addr %s188, 128
          %s193 = scalar_lea.hbm %s1, %s192
          %s195 = sshll.u32 %s187, 4
          %s196 = int_to_ptr.vmem [resolvable:$true] %s195
          %198 = dma.hbm_to_vmem [thread:$0]  %s193, 128, %s196, %s184
        $region24: #{tpu_custom_call.1} parent=15 // pred_fallthru
          _
      $region16: #{tpu_custom_call.1} parent=5 // pred_fallthru
        _
      %p199 = scmp.le.s32.totalorder 1, %s22
      %p200 = scmp.lt.s32.totalorder %s22, 3
      %p201 = pnand %p199, %p200
      %p202 = pneg %p201
      // Predicated region
      $region25: #{tpu_custom_call.1} parent=5 // pred_check
        _
      $region26: #{tpu_custom_call.1} parent=5 // pred_check_branch
        %204 = sbr.rel (%p201) target = $region28
      $region27: #{tpu_custom_call.1} parent=5 // pred_region
        %s205 = ssub.s32 %s22, 1
        %s206 = sand.u32 %s49, 1
        %s207 = scalar_lea.sflag [#allocation3], %s206
        %s208 = sand.u32 %s49, 1
        %s209 = smul.addr %s208, 8
        %s210 = scalar_lea.vmem [#allocation2], %s209
        // Predicated region
        $region29: #{tpu_custom_call.1} parent=27 // pred_check
          %p211 = pneg %p62
        $region30: #{tpu_custom_call.1} parent=27 // pred_check_branch
          %213 = sbr.rel (%p211) target = $region32
        $region31: #{tpu_custom_call.1} parent=27 // pred_region
          %214 = dma.done %s207, 128
        $region32: #{tpu_custom_call.1} parent=27 // pred_fallthru
          _
        %s215 = sand.u32 %s77, 1
        %s216 = scalar_lea.sflag [#allocation6], %s215
        %s217 = sand.u32 %s77, 1
        %s218 = smul.addr %s217, 8
        %s219 = scalar_lea.vmem [#allocation5], %s218
        // Predicated region
        $region33: #{tpu_custom_call.1} parent=27 // pred_check
          %p220 = pneg %p90
        $region34: #{tpu_custom_call.1} parent=27 // pred_check_branch
          %222 = sbr.rel (%p220) target = $region36
        $region35: #{tpu_custom_call.1} parent=27 // pred_region
          %223 = dma.done %s216, 128
        $region36: #{tpu_custom_call.1} parent=27 // pred_fallthru
          _
        %s224 = sand.u32 %s49, 1
        %s225 = scalar_lea.sflag [#allocation3], %s224
        %s226 = sand.u32 %s49, 1
        %s227 = smul.addr %s226, 8
        %s228 = scalar_lea.vmem [#allocation2], %s227
        %p229 = pneg %p62
        %p230 = pneg %p59
        %s231 = sand.u32 %s77, 1
        %s232 = scalar_lea.sflag [#allocation6], %s231
        %s233 = sand.u32 %s77, 1
        %s234 = smul.addr %s233, 8
        %s235 = scalar_lea.vmem [#allocation5], %s234
        %p236 = pneg %p90
        %p237 = pneg %p87
        %p238 = pneg %p116
        %p239 = pneg %p113
        %s240 = sand.u32 %s103, 1
        %s241 = scalar_lea.sflag [#allocation4], %s240
        %s242 = sand.u32 %s103, 1
        %s243 = smul.addr %s242, 8
        %s244 = scalar_lea.vmem [#allocation7], %s243
        %p245 = pneg %p142
        %p246 = pneg %p139
        %s247 = sand.u32 %s129, 1
        %s248 = scalar_lea.sflag [#allocation9], %s247
        %s249 = sand.u32 %s129, 1
        %s250 = smul.addr %s249, 8
        %s251 = scalar_lea.vmem [#allocation8], %s250
        %s252 = sadd.s32 %s31, %s32
        %s253 = sadd.s32 %s31, %s32
        %p254 = scmp.eq.s32.totalorder %s32, 0
        // Predicated region
        $region37: #{tpu_custom_call.1} parent=27 // pred_check
          %p255 = pneg %p254
        $region38: #{tpu_custom_call.1} parent=27 // pred_check_branch
          %257 = sbr.rel (%p255) target = $region40
        $region39: #{tpu_custom_call.1} parent=27 // pred_region
          %258 = vst [vmem:[%s244] sm:$0xff] 0.0
          %259 = vst [vmem:[%s251] sm:$0xff] 0.0
        $region40: #{tpu_custom_call.1} parent=27 // pred_fallthru
          _
        %v260 = vld [vmem:[%s210] sm:$0xff]
        %v261 = vld [vmem:[%s219] sm:$0xff]
        %s262 = sadd.s32 %s31, %s32
        %s263 = smul.u32 %s262, 8
        %v264 = vlaneseq
        %v265 = vshrl.u32 %v264, 7
        %v266 = vstv %s263
        %v267 = vadd.s32 %v265, %v266
        %v268 = vlaneseq
        %v269 = vand.u32 %v268, 127
        %v270 = vmul.u32 %v267, 128
        %v271 = vadd.s32 %v270, %v269
        %vm272 = vcmp.lt.s32.totalorder %v271, 8
        %v273 = vmul.f32 %v261, %v260
        %v274 = vmax.f32 %v260, 0.0
        %v275 = vsub.f32 %v273, %v274
        %v276 = vand.u32 2147483647, %v260
        %v277 = vsub.f32 0.0, %v276
        %v278 = vmul.f32 %v277, 1.442695
        %v279 = vpow.pop %v278
        %v280 = vadd.f32 %v279, 1.0
        %v281 = vlog2.pop %v280
        %v282 = vmul.f32 %v281, 0.6931472
        %v283 = vmul.f32 -0.5, %v279
        %v284 = vadd.f32 %v283, 1.0
        %v285 = vmul.f32 %v284, %v279
        %v286 = vand.u32 2147483647, %v279
        %vm287 = vcmp.lt.f32.partialorder %v286, 0.0004427343
        %v288 = vsel %vm287, %v285, %v282
        %v289 = vsub.f32 %v275, %v288
        %v290 = vsel %vm272, %v289, 0.0
        %vm291 = vcmp.eq.f32.partialorder %v261, 0.0
        %vm292 = vmand %vm272, %vm291
        %v293 = vsel %vm292, 1.0, 0.0
        %v294 = vld [vmem:[%s244] sm:$0xff]
        %v295 = vadd.f32 %v290, 0.0
        %v296 = vadd.f32 %v294, %v295
        %297 = vst [vmem:[%s244] sm:$0xff] %v296
        %v298 = vld [vmem:[%s251] sm:$0xff]
        %v299 = vadd.f32 %v293, 0.0
        %v300 = vadd.f32 %v298, %v299
        %301 = vst [vmem:[%s251] sm:$0xff] %v300
        %s302 = sand.u32 %s103, 1
        %s303 = scalar_lea.sflag [#allocation4], %s302
        %s304 = sand.u32 %s103, 1
        %s305 = smul.addr %s304, 8
        %s306 = scalar_lea.vmem [#allocation7], %s305
        %s307 = sand.u32 %s129, 1
        %s308 = scalar_lea.sflag [#allocation9], %s307
        %s309 = sand.u32 %s129, 1
        %s310 = smul.addr %s309, 8
        %s311 = scalar_lea.vmem [#allocation8], %s310
        // Predicated region
        $region41: #{tpu_custom_call.1} parent=27 // pred_check
          %p312 = pneg %p113
        $region42: #{tpu_custom_call.1} parent=27 // pred_check_branch
          %314 = sbr.rel (%p312) target = $region44
        $region43: #{tpu_custom_call.1} parent=27 // pred_region
          %s316 = ssub.s32 128, 128
          %317 = vsyncadd %s303, %s316
          %s318 = smul.addr %s31, 128
          %s319 = scalar_lea.hbm %s2, %s318
          %s321 = sshll.u32 %s306, 4
          %s322 = int_to_ptr.vmem [resolvable:$true] %s321
          %324 = dma.vmem_to_hbm [thread:$0]  %s322, 128, %s319, %s303
        $region44: #{tpu_custom_call.1} parent=27 // pred_fallthru
          _
        // Predicated region
        $region45: #{tpu_custom_call.1} parent=27 // pred_check
          %p325 = pneg %p139
        $region46: #{tpu_custom_call.1} parent=27 // pred_check_branch
          %327 = sbr.rel (%p325) target = $region48
        $region47: #{tpu_custom_call.1} parent=27 // pred_region
          %s329 = ssub.s32 128, 128
          %330 = vsyncadd %s308, %s329
          %s331 = smul.addr %s31, 128
          %s332 = scalar_lea.hbm %s3, %s331
          %s334 = sshll.u32 %s311, 4
          %s335 = int_to_ptr.vmem [resolvable:$true] %s334
          %337 = dma.vmem_to_hbm [thread:$0]  %s335, 128, %s332, %s308
        $region48: #{tpu_custom_call.1} parent=27 // pred_fallthru
          _
      $region28: #{tpu_custom_call.1} parent=5 // pred_fallthru
        _
      %p338 = scmp.le.s32.totalorder 2, %s22
      // Predicated region
      $region49: #{tpu_custom_call.1} parent=5 // pred_check
        %p339 = pneg %p338
      $region50: #{tpu_custom_call.1} parent=5 // pred_check_branch
        %341 = sbr.rel (%p339) target = $region52
      $region51: #{tpu_custom_call.1} parent=5 // pred_region
        %s342 = ssub.s32 %s22, 2
        // Predicated region
        $region53: #{tpu_custom_call.1} parent=51 // pred_check
          %p343 = pneg %p119
        $region54: #{tpu_custom_call.1} parent=51 // pred_check_branch
          %345 = sbr.rel (%p343) target = $region56
        $region55: #{tpu_custom_call.1} parent=51 // pred_region
          %s346 = sand.u32 %s104, 1
          %s347 = scalar_lea.sflag [#allocation4], %s346
          %s348 = sand.u32 %s104, 1
          %s349 = smul.addr %s348, 8
          %s350 = scalar_lea.vmem [#allocation7], %s349
          %351 = dma.done %s347, 128
        $region56: #{tpu_custom_call.1} parent=51 // pred_fallthru
          _
        // Predicated region
        $region57: #{tpu_custom_call.1} parent=51 // pred_check
          %p352 = pneg %p145
        $region58: #{tpu_custom_call.1} parent=51 // pred_check_branch
          %354 = sbr.rel (%p352) target = $region60
        $region59: #{tpu_custom_call.1} parent=51 // pred_region
          %s355 = sand.u32 %s130, 1
          %s356 = scalar_lea.sflag [#allocation9], %s355
          %s357 = sand.u32 %s130, 1
          %s358 = smul.addr %s357, 8
          %s359 = scalar_lea.vmem [#allocation8], %s358
          %360 = dma.done %s356, 128
        $region60: #{tpu_custom_call.1} parent=51 // pred_fallthru
          _
      $region52: #{tpu_custom_call.1} parent=5 // pred_fallthru
        _
    $region6: #{tpu_custom_call.1} parent=1 // loop_footer
      %s26 = sadd.s32 1, %s22
    $region7: #{tpu_custom_call.1} parent=1 // loop_footer_branch
      %21 = sbr.rel target = $region3
    $region8: #{tpu_custom_call.1} parent=1 // loop_exit
      _
    %361 = vsyncpa [#allocation3], 1
    %s362 = scalar_lea.sflag [#allocation3], 1
    %363 = vsyncpa %s362, 1
    %364 = vsyncpa [#allocation6], 1
    %s365 = scalar_lea.sflag [#allocation6], 1
    %366 = vsyncpa %s365, 1
    %367 = vsyncpa [#allocation4], 1
    %s368 = scalar_lea.sflag [#allocation4], 1
    %369 = vsyncpa %s368, 1
    %370 = vsyncpa [#allocation9], 1
    %s371 = scalar_lea.sflag [#allocation9], 1
    %372 = vsyncpa %s371, 1

</llo_original>
